<compile_context>
chip_gen: v7x
topology: tpu7x:2x2x1
jax: 0.10.0
libtpu: 0.0.40
codegen_flags: <defaults>
</compile_context>

<pallas_src>
import jax
import jax.numpy as jnp
from jax.experimental import pallas as pl
from jax.experimental.pallas import tpu as pltpu


def _gated_linear_kernel(x_ref, w_ref, b_ref, g_ref, o_ref, acc_ref):
    """Computes one (tm, tn) output tile: out = (x @ w + b) * tanh(gate).

    Grid axis 2 is the K reduction; acc_ref is an f32 VMEM accumulator that
    stays resident across the K axis (output BlockSpec ignores k).
    """
    k = pl.program_id(2)

    @pl.when(k == 0)
    def _init():
        acc_ref[...] = jnp.zeros_like(acc_ref)

    acc_ref[...] += jnp.dot(
        x_ref[...], w_ref[...], preferred_element_type=jnp.float32
    )

    @pl.when(k == pl.num_programs(2) - 1)
    def _finalize():
        # Fused epilogue: bias add + scalar gate (tanh runs on the EUP slot).
        gate = jnp.tanh(g_ref[...].astype(jnp.float32))          # (1, 1)
        out = (acc_ref[...] + b_ref[...].astype(jnp.float32)) * gate
        o_ref[...] = out.astype(o_ref.dtype)


def _pick_tile(dim: int, cap: int, align: int) -> int:
    """Largest tile <= cap that is a multiple of `align` and divides `dim`.

    Falls back to the full dim (always a legal block shape) when no such
    divisor exists, so no wrapper-side padding is ever needed.
    """
    if dim <= cap:
        return dim
    t = (cap // align) * align
    while t >= align:
        if dim % t == 0:
            return t
        t -= align
    return dim


def gated_linear(x: jax.Array, w: jax.Array, b: jax.Array, gate: jax.Array,
                 *, tm_cap: int = 256, tn_cap: int = 256, tk_cap: int = 512
                 ) -> jax.Array:
    """y = (x @ w + b) * tanh(gate), fused in a single Pallas matmul kernel.

    x    : (..., in_dim)
    w    : (in_dim, out_dim)      (already transposed vs. torch nn.Linear)
    b    : (out_dim,)
    gate : scalar parameter (any shape with a single element)
    """
    orig_shape = x.shape
    in_dim = orig_shape[-1]
    out_dim = w.shape[1]
    assert w.shape[0] == in_dim, "weight / input dim mismatch"
    assert b.shape[-1] == out_dim, "bias / output dim mismatch"

    x2 = x.reshape(-1, in_dim)                     # (M, K) — no padding
    M, K = x2.shape
    N = out_dim
    b2 = b.reshape(1, N)                           # (1, N)  lane-major bias
    g2 = gate.reshape(1, 1).astype(jnp.float32)    # (1, 1)  scalar gate

    # MXU-friendly tiles: 128-multiples on lane dims (tn, tk), 8-multiples on
    # sublane (tm); caps keep double-buffered VMEM small on v5e/v6e/v7x.
    tm = _pick_tile(M, tm_cap, 8)
    tn = _pick_tile(N, tn_cap, 128)
    tk = _pick_tile(K, tk_cap, 128)

    grid = (M // tm, N // tn, K // tk)

    out = pl.pallas_call(
        _gated_linear_kernel,
        out_shape=jax.ShapeDtypeStruct((M, N), x.dtype),
        grid_spec=pltpu.PrefetchScalarGridSpec(
            num_scalar_prefetch=0,
            grid=grid,
            in_specs=[
                pl.BlockSpec((tm, tk), lambda i, j, k: (i, k)),   # x tile
                pl.BlockSpec((tk, tn), lambda i, j, k: (k, j)),   # w tile
                pl.BlockSpec((1, tn), lambda i, j, k: (0, j)),    # bias tile
                pl.BlockSpec((1, 1), lambda i, j, k: (0, 0)),     # gate scalar
            ],
            out_specs=pl.BlockSpec((tm, tn), lambda i, j, k: (i, j)),
            scratch_shapes=[pltpu.VMEM((tm, tn), jnp.float32)],
        ),
        compiler_params=pltpu.CompilerParams(
            # M / N axes parallel (megacore sharding on v7x), K reduction last.
            dimension_semantics=("parallel", "parallel", "arbitrary"),
            vmem_limit_bytes=64 * 1024 * 1024,
        ),
    )(x2, w, b2, g2)

    return out.reshape(*orig_shape[:-1], N)


if __name__ == "__main__":
    key = jax.random.PRNGKey(0)
    kx, kw, kb, kg = jax.random.split(key, 4)

    # Connector-style feature tensor: (batch, seq, hidden_in) -> hidden_out.
    B, T, D_IN, D_OUT = 2, 8, 32, 64
    x = jax.random.normal(kx, (B, T, D_IN), dtype=jnp.float32)
    w = jax.random.normal(kw, (D_IN, D_OUT), dtype=jnp.float32) * 0.05
    b = jax.random.normal(kb, (D_OUT,), dtype=jnp.float32) * 0.1
    # torch init is zeros (=> zero output); use a nonzero gate so the check is
    # meaningful. Shape matches torch's (1, 1, 1) parameter.
    gate = jax.random.normal(kg, (1, 1, 1), dtype=jnp.float32) * 0.5

    y = gated_linear(x, w, b, gate)
    y = jax.block_until_ready(y)

    # Pure-JAX reference.
    y_ref = (jnp.einsum("btk,kn->btn", x, w,
                        preferred_element_type=jnp.float32) + b) * jnp.tanh(
        gate.reshape(()))

    assert y.shape == (B, T, D_OUT) and y.dtype == x.dtype
    assert bool(jnp.allclose(y, y_ref, rtol=1e-5, atol=1e-5)), \
        "GatedLinear kernel mismatch"
    print("KERNEL_OK")
</pallas_src>

<mosaic_0001>
module attributes {stable_mosaic.version = 11 : i64} {
  func.func @_gated_linear_kernel(%arg0: i32, %arg1: i32, %arg2: i32, %arg3: memref<16x32xf32, #tpu.memory_space<vmem>>, %arg4: memref<32x64xf32, #tpu.memory_space<vmem>>, %arg5: memref<1x64xf32, #tpu.memory_space<vmem>>, %arg6: memref<1x1xf32, #tpu.memory_space<vmem>>, %arg7: memref<16x64xf32, #tpu.memory_space<vmem>>, %arg8: memref<16x64xf32, #tpu.memory_space<vmem>>) attributes {dimension_semantics = [#tpu.dimension_semantics<parallel>, #tpu.dimension_semantics<parallel>, #tpu.dimension_semantics<arbitrary>], iteration_bounds = array<i64: 1, 1, 1>, scalar_prefetch = 0 : i64, scratch_operands = 1 : i64, tpu.core_type = #tpu.core_type<tc>, window_params = [{transform_indices = @transform_0, window_bounds = array<i64: 16, 32>}, {transform_indices = @transform_1, window_bounds = array<i64: 32, 64>}, {transform_indices = @transform_2, window_bounds = array<i64: 1, 64>}, {pipeline_mode = #tpu.pipeline_mode<synchronous>, transform_indices = @transform_3, window_bounds = array<i64: 1, 1>}, {transform_indices = @transform_4, window_bounds = array<i64: 16, 64>}]} {
    %c0_i32 = arith.constant 0 : i32
    %0 = arith.cmpi eq, %arg2, %c0_i32 : i32
    %1 = arith.extui %0 : i1 to i32
    %c0_i32_0 = arith.constant 0 : i32
    %2 = arith.cmpi ne, %1, %c0_i32_0 : i32
    scf.if %2 {
      %cst_10 = arith.constant 0.000000e+00 : f32
      %12 = vector.broadcast %cst_10 : f32 to vector<16x64xf32>
      %c0_11 = arith.constant 0 : index
      %c0_12 = arith.constant 0 : index
      %13 = vector.load %arg8[%c0_11, %c0_12] : memref<16x64xf32, #tpu.memory_space<vmem>>, vector<16x64xf32>
      tpu.vector_store %arg8[%c0_11, %c0_12], %12 {strides = array<i32>} : memref<16x64xf32, #tpu.memory_space<vmem>>, vector<16x64xf32>,
    } else {
    }
    %c0 = arith.constant 0 : index
    %c0_1 = arith.constant 0 : index
    %3 = vector.load %arg8[%c0, %c0_1] : memref<16x64xf32, #tpu.memory_space<vmem>>, vector<16x64xf32>
    %c0_2 = arith.constant 0 : index
    %c0_3 = arith.constant 0 : index
    %4 = vector.load %arg3[%c0_2, %c0_3] : memref<16x32xf32, #tpu.memory_space<vmem>>, vector<16x32xf32>
    %c0_4 = arith.constant 0 : index
    %c0_5 = arith.constant 0 : index
    %5 = vector.load %arg4[%c0_4, %c0_5] : memref<32x64xf32, #tpu.memory_space<vmem>>, vector<32x64xf32>
    %cst = arith.constant dense<0.000000e+00> : vector<16x64xf32>
    %6 = tpu.matmul %4, %5, %cst {dimension_numbers = #tpu.dot_dimension_numbers<[1], [0], [0], [1], [0, 0, 1, 1], [], []>} : vector<16x32xf32>, vector<32x64xf32>, vector<16x64xf32> -> vector<16x64xf32>
    %7 = arith.addf %3, %6 : vector<16x64xf32>
    %c0_6 = arith.constant 0 : index
    %c0_7 = arith.constant 0 : index
    %8 = vector.load %arg8[%c0_6, %c0_7] : memref<16x64xf32, #tpu.memory_space<vmem>>, vector<16x64xf32>
    tpu.vector_store %arg8[%c0_6, %c0_7], %7 {strides = array<i32>} : memref<16x64xf32, #tpu.memory_space<vmem>>, vector<16x64xf32>,
    %c0_i32_8 = arith.constant 0 : i32
    %9 = arith.cmpi eq, %arg2, %c0_i32_8 : i32
    %10 = arith.extui %9 : i1 to i32
    %c0_i32_9 = arith.constant 0 : i32
    %11 = arith.cmpi ne, %10, %c0_i32_9 : i32
    scf.if %11 {
      %c0_10 = arith.constant 0 : index
      %c0_11 = arith.constant 0 : index
      %12 = vector.load %arg6[%c0_10, %c0_11] : memref<1x1xf32, #tpu.memory_space<vmem>>, vector<1x1xf32>
      %13 = math.tanh %12 : vector<1x1xf32>
      %c0_12 = arith.constant 0 : index
      %c0_13 = arith.constant 0 : index
      %14 = vector.load %arg8[%c0_12, %c0_13] : memref<16x64xf32, #tpu.memory_space<vmem>>, vector<16x64xf32>
      %c0_14 = arith.constant 0 : index
      %c0_15 = arith.constant 0 : index
      %15 = vector.load %arg5[%c0_14, %c0_15] : memref<1x64xf32, #tpu.memory_space<vmem>>, vector<1x64xf32>
      %16 = vector.broadcast %15 : vector<1x64xf32> to vector<16x64xf32>
      %17 = arith.addf %14, %16 : vector<16x64xf32>
      %18 = vector.broadcast %13 : vector<1x1xf32> to vector<16x64xf32>
      %19 = arith.mulf %17, %18 : vector<16x64xf32>
      %c0_16 = arith.constant 0 : index
      %c0_17 = arith.constant 0 : index
      %20 = vector.load %arg7[%c0_16, %c0_17] : memref<16x64xf32, #tpu.memory_space<vmem>>, vector<16x64xf32>
      tpu.vector_store %arg7[%c0_16, %c0_17], %19 {strides = array<i32>} : memref<16x64xf32, #tpu.memory_space<vmem>>, vector<16x64xf32>,
    } else {
    }
    return
  }
  func.func @transform_0(%arg0: i32, %arg1: i32, %arg2: i32) -> (i32, i32) {
    %c0_i32 = arith.constant 0 : i32
    return %arg0, %arg2 : i32, i32
  }
  func.func @transform_1(%arg0: i32, %arg1: i32, %arg2: i32) -> (i32, i32) {
    %c0_i32 = arith.constant 0 : i32
    return %arg2, %arg1 : i32, i32
  }
  func.func @transform_2(%arg0: i32, %arg1: i32, %arg2: i32) -> (i32, i32) {
    %c0_i32 = arith.constant 0 : i32
    %c0_i32_0 = arith.constant 0 : i32
    return %c0_i32, %arg1 : i32, i32
  }
  func.func @transform_3(%arg0: i32, %arg1: i32, %arg2: i32) -> (i32, i32) {
    %c0_i32 = arith.constant 0 : i32
    %c0_i32_0 = arith.constant 0 : i32
    %c0_i32_1 = arith.constant 0 : i32
    return %c0_i32, %c0_i32_0 : i32, i32
  }
  func.func @transform_4(%arg0: i32, %arg1: i32, %arg2: i32) -> (i32, i32) {
    %c0_i32 = arith.constant 0 : i32
    return %arg0, %arg1 : i32, i32
  }
}

</mosaic_0001>

<llo_original>
// kernel: tpu_custom_call.1
$region0: #{tpu_custom_call.1}
  #allocation0 [shape = 'u32[]', space=smem, size = 0x4, offset = 0x4, fixed_abs, tag = 'smem constant byte address 0x4 - core index']
  #allocation1 [shape = 'u32[144,128]{1,0:T(1,128)}', space=vmem, size = 0x12000, scoped, tag = 'internal scratch']
  #allocation2 [shape = 'f32[16,64]{1,0:T(8,128)}', space=vmem, size = 0x2000, scoped, tag = 'scratch operand']
  #allocation3 [shape = 'f32[1,1]{1,0:T(1,128)S(1)}', space=vmem, size = 0x200, scoped, tag = 'scoped memory for tpu_custom_call.1']
  %s0 = inlined_call_operand.hbm [shape: f32[16,32], index: 0, kind: input, shape index: {}]
  %s1 = inlined_call_operand.hbm [shape: f32[32,64], index: 1, kind: input, shape index: {}]
  %s2 = inlined_call_operand.hbm [shape: f32[1,64], index: 2, kind: input, shape index: {}]
  %s3 = inlined_call_operand.<no memory space> [shape: f32[1,1], index: 3, kind: input, shape index: {}]
  %s4 = inlined_call_operand.hbm [shape: f32[16,64], index: 4, kind: output, shape index: {}]
  %s5 = sld [smem:[#allocation0]]
  $region46: #{tpu_custom_call.1} parent=0
    _
  %s7 = ssub.s32 1, %s5
  %s8 = scalar_select 0, %s7, %s5
  %v9 = vstv %s3
  %10 = vst [vmem:[#allocation3] sm:$0x1] %v9
  $region1: #{tpu_custom_call.1} parent=0
    #allocation4 [shape = 'u8[8192]{0}', space=vmem, size = 0x2000, scoped, tag = 'input window, operand 0, single buffered']
    #allocation5 [shape = 's32[1]{0}', space=sflag, size = 0x4, scoped, tag = 'scoped memory for tpu_custom_call.1']
    #allocation6 [shape = 's32[1]{0}', space=sflag, size = 0x4, scoped, tag = 'scoped memory for tpu_custom_call.1']
    #allocation7 [shape = 'u8[16384]{0}', space=vmem, size = 0x4000, scoped, tag = 'input window, operand 1, single buffered']
    #allocation8 [shape = 's32[1]{0}', space=sflag, size = 0x4, scoped, tag = 'scoped memory for tpu_custom_call.1']
    #allocation9 [shape = 'u8[512]{0}', space=vmem, size = 0x400, scoped, tag = 'input window, operand 2, single buffered']
    #allocation10 [shape = 'u8[8192]{0}', space=vmem, size = 0x2000, scoped, tag = 'output window, operand 0, single buffered']
    %11 = vsyncpa [#allocation5], 0
    %12 = vsyncpa [#allocation8], 0
    %13 = vsyncpa [#allocation6], 0
    // Predicated region
    $region2: #{tpu_custom_call.1} parent=1 // pred_check
      _
    $region3: #{tpu_custom_call.1} parent=1 // pred_check_branch
      %15 = sbr.rel (0) target = $region5
    $region4: #{tpu_custom_call.1} parent=1 // pred_region
      %s17 = ssub.s32 256, 256
      %18 = vsyncadd [#allocation5], %s17
      %s19 = sshll.u32 [#allocation4], 4
      %s20 = int_to_ptr.vmem [resolvable:$true] %s19
      %25 = dma.hbm_to_vmem [thread:$0]  %s0, 256, %s20, [#allocation5], 128, 128, 8
    $region5: #{tpu_custom_call.1} parent=1 // pred_fallthru
      _
    // Predicated region
    $region6: #{tpu_custom_call.1} parent=1 // pred_check
      _
    $region7: #{tpu_custom_call.1} parent=1 // pred_check_branch
      %27 = sbr.rel (0) target = $region9
    $region8: #{tpu_custom_call.1} parent=1 // pred_region
      %s29 = ssub.s32 512, 512
      %30 = vsyncadd [#allocation8], %s29
      %s31 = sshll.u32 [#allocation7], 4
      %s32 = int_to_ptr.vmem [resolvable:$true] %s31
      %37 = dma.hbm_to_vmem [thread:$0]  %s1, 512, %s32, [#allocation8], 128, 128, 8
    $region9: #{tpu_custom_call.1} parent=1 // pred_fallthru
      _
    // Predicated region
    $region10: #{tpu_custom_call.1} parent=1 // pred_check
      _
    $region11: #{tpu_custom_call.1} parent=1 // pred_check_branch
      %39 = sbr.rel (0) target = $region13
    $region12: #{tpu_custom_call.1} parent=1 // pred_region
      %s41 = ssub.s32 16, 16
      %42 = vsyncadd [#allocation8], %s41
      %s44 = sshll.u32 [#allocation9], 4
      %s45 = int_to_ptr.vmem [resolvable:$true] %s44
      %47 = dma.hbm_to_vmem [thread:$0]  %s2, 16, %s45, [#allocation8]
    $region13: #{tpu_custom_call.1} parent=1 // pred_fallthru
      _
    // Predicated region
    $region14: #{tpu_custom_call.1} parent=1 // pred_check
      _
    $region15: #{tpu_custom_call.1} parent=1 // pred_check_branch
      %49 = sbr.rel (0) target = $region17
    $region16: #{tpu_custom_call.1} parent=1 // pred_region
      _
    $region17: #{tpu_custom_call.1} parent=1 // pred_fallthru
      _
    // Predicated region
    $region18: #{tpu_custom_call.1} parent=1 // pred_check
      _
    $region19: #{tpu_custom_call.1} parent=1 // pred_check_branch
      %51 = sbr.rel (0) target = $region21
    $region20: #{tpu_custom_call.1} parent=1 // pred_region
      %52 = dma.done [#allocation5], 256
    $region21: #{tpu_custom_call.1} parent=1 // pred_fallthru
      _
    // Predicated region
    $region22: #{tpu_custom_call.1} parent=1 // pred_check
      _
    $region23: #{tpu_custom_call.1} parent=1 // pred_check_branch
      %54 = sbr.rel (0) target = $region25
    $region24: #{tpu_custom_call.1} parent=1 // pred_region
      %55 = dma.done [#allocation8], 512
    $region25: #{tpu_custom_call.1} parent=1 // pred_fallthru
      _
    // Predicated region
    $region26: #{tpu_custom_call.1} parent=1 // pred_check
      _
    $region27: #{tpu_custom_call.1} parent=1 // pred_check_branch
      %57 = sbr.rel (0) target = $region29
    $region28: #{tpu_custom_call.1} parent=1 // pred_region
      %58 = dma.done [#allocation8], 16
    $region29: #{tpu_custom_call.1} parent=1 // pred_fallthru
      _
    %p59 = scmp.eq.s32.totalorder 0, 0
    // Predicated region
    $region30: #{tpu_custom_call.1} parent=1 // pred_check
      %p60 = pneg %p59
    $region31: #{tpu_custom_call.1} parent=1 // pred_check_branch
      %62 = sbr.rel (%p60) target = $region33
    $region32: #{tpu_custom_call.1} parent=1 // pred_region
      %vm63 = vcmask 523264
      %64 = vst.msk [vmem:[#allocation2] sm:$0xff] %vm63, 0.0
      %65 = vst.msk [vmem:[#allocation2 + $0x8] sm:$0xff] %vm63, 0.0
    $region33: #{tpu_custom_call.1} parent=1 // pred_fallthru
      _
    %v66 = vld [vmem:[#allocation2] sm:$0xff]
    %v67 = vld [vmem:[#allocation2 + $0x8] sm:$0xff]
    %v68 = vld [vmem:[#allocation4] sm:$0xff]
    %v69 = vld [vmem:[#allocation4 + $0x8] sm:$0xff]
    %v70 = vld [vmem:[#allocation7] sm:$0xff]
    %v71 = vld [vmem:[#allocation7 + $0x8] sm:$0xff]
    %v72 = vld [vmem:[#allocation7 + $0x10] sm:$0xff]
    %v73 = vld [vmem:[#allocation7 + $0x18] sm:$0xff]
    %vm74 = vcmask 261120
    %v76 = vsel %vm74, %v68, 0
    %v79 = vsel %vm74, %v69, 0
    %81 = vmatprep.subr.mxu0 0.0
    %82 = vmatpush1.msra.mxu0 %v70
    %83 = vmatprep.subr.mxu0 0.0
    %84 = vmatpush1.msra.mxu0 %v71
    %85 = vmatprep.subr.mxu0 0.0
    %86 = vmatpush1.msra.mxu0 %v72
    %87 = vmatprep.subr.mxu0 0.0
    %88 = vmatpush1.msra.mxu0 %v73
    %89 = vmatprep.subr.mxu0 0.0
    %90 = vmatpush1.msra.mxu0 0.0
    %91 = vmatprep.subr.mxu0 0.0
    %92 = vmatpush1.msra.mxu0 0.0
    %93 = vmatprep.subr.mxu0 0.0
    %94 = vmatpush1.msra.mxu0 0.0
    %95 = vmatprep.subr.mxu0 0.0
    %96 = vmatpush1.msra.mxu0 0.0
    %97 = vmatprep.subr.mxu0 0.0
    %98 = vmatpush1.msra.mxu0 0.0
    %99 = vmatprep.subr.mxu0 0.0
    %100 = vmatpush1.msra.mxu0 0.0
    %101 = vmatprep.subr.mxu0 0.0
    %102 = vmatpush1.msra.mxu0 0.0
    %103 = vmatprep.subr.mxu0 0.0
    %104 = vmatpush1.msra.mxu0 0.0
    %105 = vmatprep.subr.mxu0 0.0
    %106 = vmatpush1.msra.mxu0 0.0
    %107 = vmatprep.subr.mxu0 0.0
    %108 = vmatpush1.msra.mxu0 0.0
    %109 = vmatprep.subr.mxu0 0.0
    %110 = vmatpush1.msra.mxu0 0.0
    %111 = vmatprep.subr.mxu0 0.0
    %112 = vmatpush1.msra.mxu0 0.0
    %113 = vmatprep.subr.mxu0 0.0
    %114 = vmatpush1.msra.mxu0 0.0
    %115 = vmatprep.subr.mxu0 0.0
    %116 = vmatpush1.msra.mxu0 0.0
    %117 = vmatprep.subr.mxu0 0.0
    %118 = vmatpush1.msra.mxu0 0.0
    %119 = vmatprep.subr.mxu0 0.0
    %120 = vmatpush1.msra.mxu0 0.0
    %121 = vmatprep.subr.mxu0 0.0
    %122 = vmatpush1.msra.mxu0 0.0
    %123 = vmatprep.subr.mxu0 0.0
    %124 = vmatpush1.msra.mxu0 0.0
    %125 = vmatprep.subr.mxu0 0.0
    %126 = vmatpush1.msra.mxu0 0.0
    %127 = vmatprep.subr.mxu0 0.0
    %128 = vmatpush1.msra.mxu0 0.0
    %129 = vmatprep.subr.mxu0 0.0
    %130 = vmatpush1.msra.mxu0 0.0
    %131 = vmatprep.subr.mxu0 0.0
    %132 = vmatpush1.msra.mxu0 0.0
    %133 = vmatprep.subr.mxu0 0.0
    %134 = vmatpush1.msra.mxu0 0.0
    %135 = vmatprep.subr.mxu0 0.0
    %136 = vmatpush1.msra.mxu0 0.0
    %137 = vmatprep.subr.mxu0 0.0
    %138 = vmatpush1.msra.mxu0 0.0
    %139 = vmatprep.subr.mxu0 0.0
    %140 = vmatpush1.msra.mxu0 0.0
    %141 = vmatprep.subr.mxu0 0.0
    %142 = vmatpush1.msra.mxu0 0.0
    %143 = vmatprep.subr.mxu0 0.0
    %144 = vmatpush1.msra.mxu0 0.0
    %145 = vmatprep.mubr.f32.mxu0 0.0
    %146 = vmatmul.mubr.f32.gmra.mrb[0].mxu0 %v76
    %v147 = vpop.f32.mrb[0].mxu0
    %v148 = vadd.f32 0.0, %v147
    %v149 = vpop.f32.mrb[0].mxu0
    %150 = vmatprep.mubr.f32.mxu0 0.0
    %151 = vmatmul.mubr.f32.gmra.mrb[0].mxu0 %v79
    %v152 = vpop.f32.mrb[0].mxu0
    %v153 = vadd.f32 0.0, %v152
    %v154 = vpop.f32.mrb[0].mxu0
    %155 = vdwg.mxu0
    %v156 = vadd.f32 %v66, %v148
    %v157 = vadd.f32 %v67, %v153
    %vm158 = vcmask 523264
    %159 = vst.msk [vmem:[#allocation2] sm:$0xff] %vm158, %v156
    %160 = vst.msk [vmem:[#allocation2 + $0x8] sm:$0xff] %vm158, %v157
    // Predicated region
    $region34: #{tpu_custom_call.1} parent=1 // pred_check
      %p161 = pneg %p59
    $region35: #{tpu_custom_call.1} parent=1 // pred_check_branch
      %163 = sbr.rel (%p161) target = $region37
    $region36: #{tpu_custom_call.1} parent=1 // pred_region
      %v164 = vld [vmem:[#allocation3] sm:$0x1]
      %v165 = vtanh.pop %v164
      %v166 = vld [vmem:[#allocation2] sm:$0xff]
      %v167 = vld [vmem:[#allocation2 + $0x8] sm:$0xff]
      %v168 = vld [vmem:[#allocation9] sm:$0x1]
      %v170 = vlaneseq
      %v171 = vshrl.u32 %v170, 7
      %v172 = vsub.s32 0, %v171
      %v173 = vrot.slane %v168, %v172
      %v175 = vadd.f32 %v166, %v173
      %v176 = vadd.f32 %v167, %v173
      %v178 = vlaneseq
      %v179 = vshrl.u32 %v178, 7
      %v180 = vsub.s32 0, %v179
      %v181 = vrot.slane %v165, %v180
      %182 = vset.pattern.permute.xlu0 0
      %183 = vperm.xlu0 %182, %v181
      %v184 = vpop.permute.xlu0 %183
      %v186 = vmul.f32 %v175, %v184
      %v187 = vmul.f32 %v176, %v184
      %188 = vst.msk [vmem:[#allocation10] sm:$0xff] %vm158, %v186
      %189 = vst.msk [vmem:[#allocation10 + $0x8] sm:$0xff] %vm158, %v187
    $region37: #{tpu_custom_call.1} parent=1 // pred_fallthru
      _
    // Predicated region
    $region38: #{tpu_custom_call.1} parent=1 // pred_check
      _
    $region39: #{tpu_custom_call.1} parent=1 // pred_check_branch
      %191 = sbr.rel (0) target = $region41
    $region40: #{tpu_custom_call.1} parent=1 // pred_region
      %s193 = ssub.s32 256, 256
      %194 = vsyncadd [#allocation6], %s193
      %s195 = sshll.u32 [#allocation10], 4
      %s196 = int_to_ptr.vmem [resolvable:$true] %s195
      %201 = dma.vmem_to_hbm [thread:$0]  %s196, 256, %s4, [#allocation6], 128, 128, 8
    $region41: #{tpu_custom_call.1} parent=1 // pred_fallthru
      _
    // Predicated region
    $region42: #{tpu_custom_call.1} parent=1 // pred_check
      _
    $region43: #{tpu_custom_call.1} parent=1 // pred_check_branch
      %203 = sbr.rel (0) target = $region45
    $region44: #{tpu_custom_call.1} parent=1 // pred_region
      %204 = dma.done [#allocation6], 256
    $region45: #{tpu_custom_call.1} parent=1 // pred_fallthru
      _
    %205 = vsyncpa [#allocation5], 1
    %206 = vsyncpa [#allocation8], 1
    %207 = vsyncpa [#allocation6], 1

</llo_original>
